<compile_context>
chip_gen: v7x
topology: tpu7x:2x2x1
jax: 0.10.0
libtpu: 0.0.40
codegen_flags: <defaults>
</compile_context>

<pallas_src>
import functools

import jax
import jax.numpy as jnp
import numpy as np
from jax import lax
from jax.experimental import pallas as pl
from jax.experimental.pallas import tpu as pltpu


def _round_up(v, m):
    return ((v + m - 1) // m) * m


# 3x3 tap ordering shared by kernel, mask builder and weight packer.
_TAPS = tuple((dy, dx) for dy in (-1, 0, 1) for dx in (-1, 0, 1))


def block_kernel(x_ref, mask_ref, w1_ref, b1_ref, w2_ref, b2_ref, o_ref,
                 col1_ref, col2_ref, *, H, W):
    """Fused conv1(3x3,p=1)+ReLU+conv2(3x3,p=1)+ReLU on one block of images.

    x_ref   : (Cin_p,  n_blk)     input, lane = b_local*H*W + h*W + w
    mask_ref: (9,      n_blk)     precomputed 0/1 border mask per 3x3 tap (f32)
    w1_ref  : (Cmid_p, 9*Cin_p)   conv1 weights, columns ordered [tap, cin]
    b1_ref  : (Cmid_p, 1)
    w2_ref  : (Cout_p, 9*Cmid_p)  conv2 weights, columns ordered [tap, cmid]
    b2_ref  : (Cout_p, 1)
    o_ref   : (Cout_p, n_blk)     output, lane-dense
    col1_ref: (9*Cin_p,  n_blk)   VMEM scratch: im2col operand for conv1
    col2_ref: (9*Cmid_p, n_blk)   VMEM scratch: im2col operand for conv2
    """
    N = x_ref.shape[-1]

    def im2col_into(col_ref, a, c_p):
        # Build the (9*C, N) im2col operand in place: one XLU roll + one
        # masked multiply per tap.  A circular lane roll only "wraps" at lanes
        # whose (h+dy, w+dx) falls outside the image; exactly those lanes are
        # zeroed by the precomputed mask, so the flattened layout stays exact.
        for t, (dy, dx) in enumerate(_TAPS):
            s = dy * W + dx  # flat lane shift for this tap
            shifted = a if s == 0 else pltpu.roll(a, shift=(-s) % N, axis=1)
            m = mask_ref[t:t + 1, :]                      # (1, N), reused twice
            col_ref[t * c_p:(t + 1) * c_p, :] = (shifted * m).astype(col_ref.dtype)

    # conv1 + ReLU : one MXU matmul, K = 9*Cin_p
    x = x_ref[...]
    im2col_into(col1_ref, x, x.shape[0])
    h1 = jnp.dot(w1_ref[...], col1_ref[...], preferred_element_type=jnp.float32)
    h1 = jnp.maximum(h1 + b1_ref[...], 0.0)

    # conv2 + ReLU : one MXU matmul, K = 9*Cmid_p
    im2col_into(col2_ref, h1, h1.shape[0])
    out = jnp.dot(w2_ref[...], col2_ref[...], preferred_element_type=jnp.float32)
    out = jnp.maximum(out + b2_ref[...], 0.0)

    o_ref[...] = out.astype(o_ref.dtype)


def _pack_conv_weight(w_hwio, cin_p, cout_p, dtype):
    """(3,3,Cin,Cout) HWIO -> (Cout_p, 9*Cin_p), columns ordered [tap, cin]."""
    kh, kw, cin, cout = w_hwio.shape
    wp = jnp.zeros((kh, kw, cin_p, cout_p), w_hwio.dtype)
    wp = wp.at[:, :, :cin, :cout].set(w_hwio)
    return jnp.transpose(wp, (3, 0, 1, 2)).reshape(cout_p, kh * kw * cin_p).astype(dtype)


def _border_masks(H, W, bb):
    """(9, bb*H*W) float32 0/1 masks: row t valid where tap t stays in-image."""
    hw = np.arange(H * W)
    hh, ww = hw // W, hw % W
    rows = []
    for dy, dx in _TAPS:
        rows.append((hh + dy >= 0) & (hh + dy < H) & (ww + dx >= 0) & (ww + dx < W))
    m = np.stack(rows, axis=0).astype(np.float32)   # (9, H*W)
    m = np.tile(m, (1, bb))                         # same pattern per image
    return jnp.asarray(m)


def _select_block(B, H, W, cin_p, cmid_p, cout_p, elem_bytes):
    """VMEM-budget-aware choice of images-per-grid-step (bb)."""
    HW = H * W

    def footprint(bb):
        n = bb * HW
        # double-buffered in/out blocks + both im2col scratches (elem_bytes)
        # + f32 h1/out temporaries + the 9-row mask.
        return (elem_bytes * n * (2 * cin_p + 9 * cin_p + 9 * cmid_p)
                + 4 * n * (2 * cout_p + cmid_p + cout_p + 9))

    # Valid bb: divides B, and the lane block is 128-aligned or the full batch.
    valid = [d for d in range(1, B + 1)
             if B % d == 0 and ((d * HW) % 128 == 0 or d == B)]
    budget = 48 * 1024 * 1024          # headroom under v7x's 64 MiB physical VMEM
    fitting = [d for d in valid if footprint(d) <= budget] or [min(valid)]
    # Prefer >=4 grid steps (v7x: 2 TCs x double-buffering), then >=2 (hide the
    # input DMA / output writeback under compute), then whatever remains; within
    # a tier take the largest bb (fewest ~0.35us per-step overheads).
    bb = fitting[0]
    for min_steps in (4, 2, 1):
        tier = [d for d in fitting if B // d >= min_steps]
        if tier:
            bb = max(tier)
            break
    return bb, footprint(bb)


def block_forward_lanes(x_lanes, mask, w1m, b1v, w2m, b2v, *, H, W, bb,
                        vmem_limit_bytes=None):
    """Run the fused Block on activations already in (Cin_p, B*H*W) layout.

    Call this directly (keeping activations lane-dense) when chaining Blocks to
    avoid the NCHW <-> lanes transposes, which are full HBM round trips.
    """
    cin_p, N = x_lanes.shape
    cmid_p = b1v.shape[0]
    cout_p = b2v.shape[0]
    n_blk = bb * H * W
    assert N % n_blk == 0
    col_dtype = w1m.dtype

    return pl.pallas_call(
        functools.partial(block_kernel, H=H, W=W),
        out_shape=jax.ShapeDtypeStruct((cout_p, N), jnp.float32),
        grid_spec=pltpu.PrefetchScalarGridSpec(
            num_scalar_prefetch=0,
            grid=(N // n_blk,),
            in_specs=[
                pl.BlockSpec((cin_p, n_blk), lambda i: (0, i)),
                pl.BlockSpec((9, n_blk), lambda i: (0, 0)),       # masks: fetched once
                pl.BlockSpec((cmid_p, 9 * cin_p), lambda i: (0, 0)),
                pl.BlockSpec((cmid_p, 1), lambda i: (0, 0)),
                pl.BlockSpec((cout_p, 9 * cmid_p), lambda i: (0, 0)),
                pl.BlockSpec((cout_p, 1), lambda i: (0, 0)),
            ],
            out_specs=pl.BlockSpec((cout_p, n_blk), lambda i: (0, i)),
            scratch_shapes=[
                pltpu.VMEM((9 * cin_p, n_blk), col_dtype),   # conv1 im2col
                pltpu.VMEM((9 * cmid_p, n_blk), col_dtype),  # conv2 im2col
            ],
        ),
        compiler_params=pltpu.CompilerParams(
            dimension_semantics=("parallel",),   # independent batch blocks
            vmem_limit_bytes=vmem_limit_bytes),
    )(x_lanes, mask, w1m, b1v, w2m, b2v)


def block_forward(x_nchw, w1, b1, w2, b2, *, use_bf16=False):
    """Pallas-backed forward pass of `Block` (batch_norm=False).

    x_nchw : (B, Cin, H, W) float32
    w1     : (3, 3, Cin, Cmid) HWIO     b1 : (Cmid,)
    w2     : (3, 3, Cmid, Cout) HWIO    b2 : (Cout,)
    use_bf16: feed the MXU bf16 operands (f32 accumulation); halves the im2col
              VMEM footprint (fast path on v6e/v7x, loosens the bb budget).
    returns: (B, Cout, H, W) float32
    """
    B, Cin, H, W = x_nchw.shape
    Cmid, Cout = w1.shape[-1], w2.shape[-1]
    pad = 16 if use_bf16 else 8                      # bf16 packs 2 rows/sublane
    Cin_p, Cmid_p, Cout_p = (_round_up(c, pad) for c in (Cin, Cmid, Cout))
    N = B * H * W
    compute_dtype = jnp.bfloat16 if use_bf16 else jnp.float32

    bb, fp = _select_block(B, H, W, Cin_p, Cmid_p, Cout_p,
                           elem_bytes=2 if use_bf16 else 4)
    vmem_limit = None
    if fp > 32 * 1024 * 1024:                        # above default scoped VMEM
        vmem_limit = min(int(fp * 1.25), 100 * 1024 * 1024)

    # NCHW -> channels-first, spatial(+batch)-in-lanes packing.  When Blocks are
    # chained, stay in this layout and call block_forward_lanes directly.
    x = jnp.transpose(x_nchw, (1, 0, 2, 3)).reshape(Cin, N)
    x = jnp.pad(x, ((0, Cin_p - Cin), (0, 0))).astype(compute_dtype)

    w1m = _pack_conv_weight(w1, Cin_p, Cmid_p, compute_dtype)   # (Cmid_p, 9*Cin_p)
    w2m = _pack_conv_weight(w2, Cmid_p, Cout_p, compute_dtype)  # (Cout_p, 9*Cmid_p)
    b1v = jnp.pad(b1, (0, Cmid_p - Cmid)).reshape(Cmid_p, 1).astype(jnp.float32)
    b2v = jnp.pad(b2, (0, Cout_p - Cout)).reshape(Cout_p, 1).astype(jnp.float32)
    mask = _border_masks(H, W, bb)                              # (9, bb*H*W) f32

    out_flat = block_forward_lanes(x, mask, w1m, b1v, w2m, b2v,
                                   H=H, W=W, bb=bb,
                                   vmem_limit_bytes=vmem_limit)
    out = out_flat.reshape(Cout_p, B, H, W)[:Cout]
    return jnp.transpose(out, (1, 0, 2, 3))          # -> NCHW


def reference_forward(x_nchw, w1, b1, w2, b2):
    """Pure-JAX reference (same math as torch Conv2d(k=3, pad=1) + ReLU, twice)."""
    x = jnp.transpose(x_nchw, (0, 2, 3, 1))
    dn = ("NHWC", "HWIO", "NHWC")
    h = lax.conv_general_dilated(x, w1, (1, 1), "SAME", dimension_numbers=dn)
    h = jnp.maximum(h + b1, 0.0)
    o = lax.conv_general_dilated(h, w2, (1, 1), "SAME", dimension_numbers=dn)
    o = jnp.maximum(o + b2, 0.0)
    return jnp.transpose(o, (0, 3, 1, 2))


if __name__ == "__main__":
    # Block(in_channels=4, mid_channel=8, out_channels=4), batch=2, 16x16 images.
    B, Cin, Cmid, Cout, H, W = 2, 4, 8, 4, 16, 16

    key = jax.random.PRNGKey(0)
    kx, kw1, kb1, kw2, kb2 = jax.random.split(key, 5)

    x = jax.random.normal(kx, (B, Cin, H, W), dtype=jnp.float32)
    # Deterministic parameter init (HWIO weights), roughly PyTorch's uniform scale.
    lim1 = 1.0 / np.sqrt(Cin * 9)
    lim2 = 1.0 / np.sqrt(Cmid * 9)
    w1 = jax.random.uniform(kw1, (3, 3, Cin, Cmid), jnp.float32, -lim1, lim1)
    b1 = jax.random.uniform(kb1, (Cmid,), jnp.float32, -lim1, lim1)
    w2 = jax.random.uniform(kw2, (3, 3, Cmid, Cout), jnp.float32, -lim2, lim2)
    b2 = jax.random.uniform(kb2, (Cout,), jnp.float32, -lim2, lim2)

    # TODO(synk): batch_norm=True branch (BatchNorm2d) not implemented; default path only.

    # f32 path (bit-faithful to the PyTorch module's math).
    out = jax.block_until_ready(block_forward(x, w1, b1, w2, b2))
    ref = jax.block_until_ready(reference_forward(x, w1, b1, w2, b2))
    np.testing.assert_allclose(np.asarray(out), np.asarray(ref), rtol=1e-5, atol=1e-5)

    # Optional bf16-operand MXU path (f32 accumulation); loose tolerance by design.
    out_bf16 = jax.block_until_ready(block_forward(x, w1, b1, w2, b2, use_bf16=True))
    np.testing.assert_allclose(np.asarray(out_bf16), np.asarray(ref), rtol=0.1, atol=0.1)

    print("KERNEL_OK")
</pallas_src>

<mosaic_0001>
module attributes {stable_mosaic.version = 11 : i64} {
  func.func @block_kernel(%arg0: i32, %arg1: memref<8x256xf32, #tpu.memory_space<vmem>>, %arg2: memref<9x256xf32, #tpu.memory_space<vmem>>, %arg3: memref<8x72xf32, #tpu.memory_space<vmem>>, %arg4: memref<8x1xf32, #tpu.memory_space<vmem>>, %arg5: memref<8x72xf32, #tpu.memory_space<vmem>>, %arg6: memref<8x1xf32, #tpu.memory_space<vmem>>, %arg7: memref<8x256xf32, #tpu.memory_space<vmem>>, %arg8: memref<72x256xf32, #tpu.memory_space<vmem>>, %arg9: memref<72x256xf32, #tpu.memory_space<vmem>>) attributes {dimension_semantics = [#tpu.dimension_semantics<parallel>], iteration_bounds = array<i64: 2>, scalar_prefetch = 0 : i64, scratch_operands = 2 : i64, tpu.core_type = #tpu.core_type<tc>, window_params = [{transform_indices = @transform_0, window_bounds = array<i64: 8, 256>}, {pipeline_mode = #tpu.pipeline_mode<synchronous>, transform_indices = @transform_1, window_bounds = array<i64: 9, 256>}, {pipeline_mode = #tpu.pipeline_mode<synchronous>, transform_indices = @transform_2, window_bounds = array<i64: 8, 72>}, {pipeline_mode = #tpu.pipeline_mode<synchronous>, transform_indices = @transform_3, window_bounds = array<i64: 8, 1>}, {pipeline_mode = #tpu.pipeline_mode<synchronous>, transform_indices = @transform_4, window_bounds = array<i64: 8, 72>}, {pipeline_mode = #tpu.pipeline_mode<synchronous>, transform_indices = @transform_5, window_bounds = array<i64: 8, 1>}, {transform_indices = @transform_6, window_bounds = array<i64: 8, 256>}]} {
    %c0 = arith.constant 0 : index
    %c0_0 = arith.constant 0 : index
    %0 = vector.load %arg1[%c0, %c0_0] : memref<8x256xf32, #tpu.memory_space<vmem>>, vector<8x256xf32>
    %c17_i32 = arith.constant 17 : i32
    %1 = tpu.dynamic_rotate %0 by %c17_i32 dim 1 : vector<8x256xf32>, i32 -> vector<8x256xf32>
    %c0_1 = arith.constant 0 : index
    %c0_2 = arith.constant 0 : index
    %2 = vector.load %arg2[%c0_1, %c0_2] : memref<9x256xf32, #tpu.memory_space<vmem>>, vector<1x256xf32>
    %3 = vector.broadcast %2 : vector<1x256xf32> to vector<8x256xf32>
    %4 = arith.mulf %1, %3 : vector<8x256xf32>
    %c0_3 = arith.constant 0 : index
    %c0_4 = arith.constant 0 : index
    %5 = vector.load %arg8[%c0_3, %c0_4] : memref<72x256xf32, #tpu.memory_space<vmem>>, vector<8x256xf32>
    tpu.vector_store %arg8[%c0_3, %c0_4], %4 {strides = array<i32>} : memref<72x256xf32, #tpu.memory_space<vmem>>, vector<8x256xf32>,
    %c16_i32 = arith.constant 16 : i32
    %6 = tpu.dynamic_rotate %0 by %c16_i32 dim 1 : vector<8x256xf32>, i32 -> vector<8x256xf32>
    %c1 = arith.constant 1 : index
    %c0_5 = arith.constant 0 : index
    %7 = vector.load %arg2[%c1, %c0_5] : memref<9x256xf32, #tpu.memory_space<vmem>>, vector<1x256xf32>
    %8 = vector.broadcast %7 : vector<1x256xf32> to vector<8x256xf32>
    %9 = arith.mulf %6, %8 : vector<8x256xf32>
    %c8 = arith.constant 8 : index
    %c0_6 = arith.constant 0 : index
    %10 = vector.load %arg8[%c8, %c0_6] : memref<72x256xf32, #tpu.memory_space<vmem>>, vector<8x256xf32>
    tpu.vector_store %arg8[%c8, %c0_6], %9 {strides = array<i32>} : memref<72x256xf32, #tpu.memory_space<vmem>>, vector<8x256xf32>,
    %c15_i32 = arith.constant 15 : i32
    %11 = tpu.dynamic_rotate %0 by %c15_i32 dim 1 : vector<8x256xf32>, i32 -> vector<8x256xf32>
    %c2 = arith.constant 2 : index
    %c0_7 = arith.constant 0 : index
    %12 = vector.load %arg2[%c2, %c0_7] : memref<9x256xf32, #tpu.memory_space<vmem>>, vector<1x256xf32>
    %13 = vector.broadcast %12 : vector<1x256xf32> to vector<8x256xf32>
    %14 = arith.mulf %11, %13 : vector<8x256xf32>
    %c16 = arith.constant 16 : index
    %c0_8 = arith.constant 0 : index
    %15 = vector.load %arg8[%c16, %c0_8] : memref<72x256xf32, #tpu.memory_space<vmem>>, vector<8x256xf32>
    tpu.vector_store %arg8[%c16, %c0_8], %14 {strides = array<i32>} : memref<72x256xf32, #tpu.memory_space<vmem>>, vector<8x256xf32>,
    %c1_i32 = arith.constant 1 : i32
    %16 = tpu.dynamic_rotate %0 by %c1_i32 dim 1 : vector<8x256xf32>, i32 -> vector<8x256xf32>
    %c3 = arith.constant 3 : index
    %c0_9 = arith.constant 0 : index
    %17 = vector.load %arg2[%c3, %c0_9] : memref<9x256xf32, #tpu.memory_space<vmem>>, vector<1x256xf32>
    %18 = vector.broadcast %17 : vector<1x256xf32> to vector<8x256xf32>
    %19 = arith.mulf %16, %18 : vector<8x256xf32>
    %c24 = arith.constant 24 : index
    %c0_10 = arith.constant 0 : index
    %20 = vector.load %arg8[%c24, %c0_10] : memref<72x256xf32, #tpu.memory_space<vmem>>, vector<8x256xf32>
    tpu.vector_store %arg8[%c24, %c0_10], %19 {strides = array<i32>} : memref<72x256xf32, #tpu.memory_space<vmem>>, vector<8x256xf32>,
    %c4 = arith.constant 4 : index
    %c0_11 = arith.constant 0 : index
    %21 = vector.load %arg2[%c4, %c0_11] : memref<9x256xf32, #tpu.memory_space<vmem>>, vector<1x256xf32>
    %22 = vector.broadcast %21 : vector<1x256xf32> to vector<8x256xf32>
    %23 = arith.mulf %0, %22 : vector<8x256xf32>
    %c32 = arith.constant 32 : index
    %c0_12 = arith.constant 0 : index
    %24 = vector.load %arg8[%c32, %c0_12] : memref<72x256xf32, #tpu.memory_space<vmem>>, vector<8x256xf32>
    tpu.vector_store %arg8[%c32, %c0_12], %23 {strides = array<i32>} : memref<72x256xf32, #tpu.memory_space<vmem>>, vector<8x256xf32>,
    %c255_i32 = arith.constant 255 : i32
    %25 = tpu.dynamic_rotate %0 by %c255_i32 dim 1 : vector<8x256xf32>, i32 -> vector<8x256xf32>
    %c5 = arith.constant 5 : index
    %c0_13 = arith.constant 0 : index
    %26 = vector.load %arg2[%c5, %c0_13] : memref<9x256xf32, #tpu.memory_space<vmem>>, vector<1x256xf32>
    %27 = vector.broadcast %26 : vector<1x256xf32> to vector<8x256xf32>
    %28 = arith.mulf %25, %27 : vector<8x256xf32>
    %c40 = arith.constant 40 : index
    %c0_14 = arith.constant 0 : index
    %29 = vector.load %arg8[%c40, %c0_14] : memref<72x256xf32, #tpu.memory_space<vmem>>, vector<8x256xf32>
    tpu.vector_store %arg8[%c40, %c0_14], %28 {strides = array<i32>} : memref<72x256xf32, #tpu.memory_space<vmem>>, vector<8x256xf32>,
    %c241_i32 = arith.constant 241 : i32
    %30 = tpu.dynamic_rotate %0 by %c241_i32 dim 1 : vector<8x256xf32>, i32 -> vector<8x256xf32>
    %c6 = arith.constant 6 : index
    %c0_15 = arith.constant 0 : index
    %31 = vector.load %arg2[%c6, %c0_15] : memref<9x256xf32, #tpu.memory_space<vmem>>, vector<1x256xf32>
    %32 = vector.broadcast %31 : vector<1x256xf32> to vector<8x256xf32>
    %33 = arith.mulf %30, %32 : vector<8x256xf32>
    %c48 = arith.constant 48 : index
    %c0_16 = arith.constant 0 : index
    %34 = vector.load %arg8[%c48, %c0_16] : memref<72x256xf32, #tpu.memory_space<vmem>>, vector<8x256xf32>
    tpu.vector_store %arg8[%c48, %c0_16], %33 {strides = array<i32>} : memref<72x256xf32, #tpu.memory_space<vmem>>, vector<8x256xf32>,
    %c240_i32 = arith.constant 240 : i32
    %35 = tpu.dynamic_rotate %0 by %c240_i32 dim 1 : vector<8x256xf32>, i32 -> vector<8x256xf32>
    %c7 = arith.constant 7 : index
    %c0_17 = arith.constant 0 : index
    %36 = vector.load %arg2[%c7, %c0_17] : memref<9x256xf32, #tpu.memory_space<vmem>>, vector<1x256xf32>
    %37 = vector.broadcast %36 : vector<1x256xf32> to vector<8x256xf32>
    %38 = arith.mulf %35, %37 : vector<8x256xf32>
    %c56 = arith.constant 56 : index
    %c0_18 = arith.constant 0 : index
    %39 = vector.load %arg8[%c56, %c0_18] : memref<72x256xf32, #tpu.memory_space<vmem>>, vector<8x256xf32>
    tpu.vector_store %arg8[%c56, %c0_18], %38 {strides = array<i32>} : memref<72x256xf32, #tpu.memory_space<vmem>>, vector<8x256xf32>,
    %c239_i32 = arith.constant 239 : i32
    %40 = tpu.dynamic_rotate %0 by %c239_i32 dim 1 : vector<8x256xf32>, i32 -> vector<8x256xf32>
    %c8_19 = arith.constant 8 : index
    %c0_20 = arith.constant 0 : index
    %41 = vector.load %arg2[%c8_19, %c0_20] : memref<9x256xf32, #tpu.memory_space<vmem>>, vector<1x256xf32>
    %42 = vector.broadcast %41 : vector<1x256xf32> to vector<8x256xf32>
    %43 = arith.mulf %40, %42 : vector<8x256xf32>
    %c64 = arith.constant 64 : index
    %c0_21 = arith.constant 0 : index
    %44 = vector.load %arg8[%c64, %c0_21] : memref<72x256xf32, #tpu.memory_space<vmem>>, vector<8x256xf32>
    tpu.vector_store %arg8[%c64, %c0_21], %43 {strides = array<i32>} : memref<72x256xf32, #tpu.memory_space<vmem>>, vector<8x256xf32>,
    %c0_22 = arith.constant 0 : index
    %c0_23 = arith.constant 0 : index
    %45 = vector.load %arg3[%c0_22, %c0_23] : memref<8x72xf32, #tpu.memory_space<vmem>>, vector<8x72xf32>
    %c0_24 = arith.constant 0 : index
    %c0_25 = arith.constant 0 : index
    %46 = vector.load %arg8[%c0_24, %c0_25] : memref<72x256xf32, #tpu.memory_space<vmem>>, vector<72x256xf32>
    %cst = arith.constant dense<0.000000e+00> : vector<8x256xf32>
    %47 = tpu.matmul %45, %46, %cst {dimension_numbers = #tpu.dot_dimension_numbers<[1], [0], [0], [1], [0, 0, 1, 1], [], []>} : vector<8x72xf32>, vector<72x256xf32>, vector<8x256xf32> -> vector<8x256xf32>
    %c0_26 = arith.constant 0 : index
    %c0_27 = arith.constant 0 : index
    %48 = vector.load %arg4[%c0_26, %c0_27] : memref<8x1xf32, #tpu.memory_space<vmem>>, vector<8x1xf32>
    %49 = vector.broadcast %48 : vector<8x1xf32> to vector<8x256xf32>
    %50 = arith.addf %47, %49 : vector<8x256xf32>
    %cst_28 = arith.constant 0.000000e+00 : f32
    %51 = vector.broadcast %cst_28 : f32 to vector<8x256xf32>
    %52 = arith.maximumf %50, %51 : vector<8x256xf32>
    %c17_i32_29 = arith.constant 17 : i32
    %53 = tpu.dynamic_rotate %52 by %c17_i32_29 dim 1 : vector<8x256xf32>, i32 -> vector<8x256xf32>
    %c0_30 = arith.constant 0 : index
    %c0_31 = arith.constant 0 : index
    %54 = vector.load %arg2[%c0_30, %c0_31] : memref<9x256xf32, #tpu.memory_space<vmem>>, vector<1x256xf32>
    %55 = vector.broadcast %54 : vector<1x256xf32> to vector<8x256xf32>
    %56 = arith.mulf %53, %55 : vector<8x256xf32>
    %c0_32 = arith.constant 0 : index
    %c0_33 = arith.constant 0 : index
    %57 = vector.load %arg9[%c0_32, %c0_33] : memref<72x256xf32, #tpu.memory_space<vmem>>, vector<8x256xf32>
    tpu.vector_store %arg9[%c0_32, %c0_33], %56 {strides = array<i32>} : memref<72x256xf32, #tpu.memory_space<vmem>>, vector<8x256xf32>,
    %c16_i32_34 = arith.constant 16 : i32
    %58 = tpu.dynamic_rotate %52 by %c16_i32_34 dim 1 : vector<8x256xf32>, i32 -> vector<8x256xf32>
    %c1_35 = arith.constant 1 : index
    %c0_36 = arith.constant 0 : index
    %59 = vector.load %arg2[%c1_35, %c0_36] : memref<9x256xf32, #tpu.memory_space<vmem>>, vector<1x256xf32>
    %60 = vector.broadcast %59 : vector<1x256xf32> to vector<8x256xf32>
    %61 = arith.mulf %58, %60 : vector<8x256xf32>
    %c8_37 = arith.constant 8 : index
    %c0_38 = arith.constant 0 : index
    %62 = vector.load %arg9[%c8_37, %c0_38] : memref<72x256xf32, #tpu.memory_space<vmem>>, vector<8x256xf32>
    tpu.vector_store %arg9[%c8_37, %c0_38], %61 {strides = array<i32>} : memref<72x256xf32, #tpu.memory_space<vmem>>, vector<8x256xf32>,
    %c15_i32_39 = arith.constant 15 : i32
    %63 = tpu.dynamic_rotate %52 by %c15_i32_39 dim 1 : vector<8x256xf32>, i32 -> vector<8x256xf32>
    %c2_40 = arith.constant 2 : index
    %c0_41 = arith.constant 0 : index
    %64 = vector.load %arg2[%c2_40, %c0_41] : memref<9x256xf32, #tpu.memory_space<vmem>>, vector<1x256xf32>
    %65 = vector.broadcast %64 : vector<1x256xf32> to vector<8x256xf32>
    %66 = arith.mulf %63, %65 : vector<8x256xf32>
    %c16_42 = arith.constant 16 : index
    %c0_43 = arith.constant 0 : index
    %67 = vector.load %arg9[%c16_42, %c0_43] : memref<72x256xf32, #tpu.memory_space<vmem>>, vector<8x256xf32>
    tpu.vector_store %arg9[%c16_42, %c0_43], %66 {strides = array<i32>} : memref<72x256xf32, #tpu.memory_space<vmem>>, vector<8x256xf32>,
    %c1_i32_44 = arith.constant 1 : i32
    %68 = tpu.dynamic_rotate %52 by %c1_i32_44 dim 1 : vector<8x256xf32>, i32 -> vector<8x256xf32>
    %c3_45 = arith.constant 3 : index
    %c0_46 = arith.constant 0 : index
    %69 = vector.load %arg2[%c3_45, %c0_46] : memref<9x256xf32, #tpu.memory_space<vmem>>, vector<1x256xf32>
    %70 = vector.broadcast %69 : vector<1x256xf32> to vector<8x256xf32>
    %71 = arith.mulf %68, %70 : vector<8x256xf32>
    %c24_47 = arith.constant 24 : index
    %c0_48 = arith.constant 0 : index
    %72 = vector.load %arg9[%c24_47, %c0_48] : memref<72x256xf32, #tpu.memory_space<vmem>>, vector<8x256xf32>
    tpu.vector_store %arg9[%c24_47, %c0_48], %71 {strides = array<i32>} : memref<72x256xf32, #tpu.memory_space<vmem>>, vector<8x256xf32>,
    %c4_49 = arith.constant 4 : index
    %c0_50 = arith.constant 0 : index
    %73 = vector.load %arg2[%c4_49, %c0_50] : memref<9x256xf32, #tpu.memory_space<vmem>>, vector<1x256xf32>
    %74 = vector.broadcast %73 : vector<1x256xf32> to vector<8x256xf32>
    %75 = arith.mulf %52, %74 : vector<8x256xf32>
    %c32_51 = arith.constant 32 : index
    %c0_52 = arith.constant 0 : index
    %76 = vector.load %arg9[%c32_51, %c0_52] : memref<72x256xf32, #tpu.memory_space<vmem>>, vector<8x256xf32>
    tpu.vector_store %arg9[%c32_51, %c0_52], %75 {strides = array<i32>} : memref<72x256xf32, #tpu.memory_space<vmem>>, vector<8x256xf32>,
    %c255_i32_53 = arith.constant 255 : i32
    %77 = tpu.dynamic_rotate %52 by %c255_i32_53 dim 1 : vector<8x256xf32>, i32 -> vector<8x256xf32>
    %c5_54 = arith.constant 5 : index
    %c0_55 = arith.constant 0 : index
    %78 = vector.load %arg2[%c5_54, %c0_55] : memref<9x256xf32, #tpu.memory_space<vmem>>, vector<1x256xf32>
    %79 = vector.broadcast %78 : vector<1x256xf32> to vector<8x256xf32>
    %80 = arith.mulf %77, %79 : vector<8x256xf32>
    %c40_56 = arith.constant 40 : index
    %c0_57 = arith.constant 0 : index
    %81 = vector.load %arg9[%c40_56, %c0_57] : memref<72x256xf32, #tpu.memory_space<vmem>>, vector<8x256xf32>
    tpu.vector_store %arg9[%c40_56, %c0_57], %80 {strides = array<i32>} : memref<72x256xf32, #tpu.memory_space<vmem>>, vector<8x256xf32>,
    %c241_i32_58 = arith.constant 241 : i32
    %82 = tpu.dynamic_rotate %52 by %c241_i32_58 dim 1 : vector<8x256xf32>, i32 -> vector<8x256xf32>
    %c6_59 = arith.constant 6 : index
    %c0_60 = arith.constant 0 : index
    %83 = vector.load %arg2[%c6_59, %c0_60] : memref<9x256xf32, #tpu.memory_space<vmem>>, vector<1x256xf32>
    %84 = vector.broadcast %83 : vector<1x256xf32> to vector<8x256xf32>
    %85 = arith.mulf %82, %84 : vector<8x256xf32>
    %c48_61 = arith.constant 48 : index
    %c0_62 = arith.constant 0 : index
    %86 = vector.load %arg9[%c48_61, %c0_62] : memref<72x256xf32, #tpu.memory_space<vmem>>, vector<8x256xf32>
    tpu.vector_store %arg9[%c48_61, %c0_62], %85 {strides = array<i32>} : memref<72x256xf32, #tpu.memory_space<vmem>>, vector<8x256xf32>,
    %c240_i32_63 = arith.constant 240 : i32
    %87 = tpu.dynamic_rotate %52 by %c240_i32_63 dim 1 : vector<8x256xf32>, i32 -> vector<8x256xf32>
    %c7_64 = arith.constant 7 : index
    %c0_65 = arith.constant 0 : index
    %88 = vector.load %arg2[%c7_64, %c0_65] : memref<9x256xf32, #tpu.memory_space<vmem>>, vector<1x256xf32>
    %89 = vector.broadcast %88 : vector<1x256xf32> to vector<8x256xf32>
    %90 = arith.mulf %87, %89 : vector<8x256xf32>
    %c56_66 = arith.constant 56 : index
    %c0_67 = arith.constant 0 : index
    %91 = vector.load %arg9[%c56_66, %c0_67] : memref<72x256xf32, #tpu.memory_space<vmem>>, vector<8x256xf32>
    tpu.vector_store %arg9[%c56_66, %c0_67], %90 {strides = array<i32>} : memref<72x256xf32, #tpu.memory_space<vmem>>, vector<8x256xf32>,
    %c239_i32_68 = arith.constant 239 : i32
    %92 = tpu.dynamic_rotate %52 by %c239_i32_68 dim 1 : vector<8x256xf32>, i32 -> vector<8x256xf32>
    %c8_69 = arith.constant 8 : index
    %c0_70 = arith.constant 0 : index
    %93 = vector.load %arg2[%c8_69, %c0_70] : memref<9x256xf32, #tpu.memory_space<vmem>>, vector<1x256xf32>
    %94 = vector.broadcast %93 : vector<1x256xf32> to vector<8x256xf32>
    %95 = arith.mulf %92, %94 : vector<8x256xf32>
    %c64_71 = arith.constant 64 : index
    %c0_72 = arith.constant 0 : index
    %96 = vector.load %arg9[%c64_71, %c0_72] : memref<72x256xf32, #tpu.memory_space<vmem>>, vector<8x256xf32>
    tpu.vector_store %arg9[%c64_71, %c0_72], %95 {strides = array<i32>} : memref<72x256xf32, #tpu.memory_space<vmem>>, vector<8x256xf32>,
    %c0_73 = arith.constant 0 : index
    %c0_74 = arith.constant 0 : index
    %97 = vector.load %arg5[%c0_73, %c0_74] : memref<8x72xf32, #tpu.memory_space<vmem>>, vector<8x72xf32>
    %c0_75 = arith.constant 0 : index
    %c0_76 = arith.constant 0 : index
    %98 = vector.load %arg9[%c0_75, %c0_76] : memref<72x256xf32, #tpu.memory_space<vmem>>, vector<72x256xf32>
    %cst_77 = arith.constant dense<0.000000e+00> : vector<8x256xf32>
    %99 = tpu.matmul %97, %98, %cst_77 {dimension_numbers = #tpu.dot_dimension_numbers<[1], [0], [0], [1], [0, 0, 1, 1], [], []>} : vector<8x72xf32>, vector<72x256xf32>, vector<8x256xf32> -> vector<8x256xf32>
    %c0_78 = arith.constant 0 : index
    %c0_79 = arith.constant 0 : index
    %100 = vector.load %arg6[%c0_78, %c0_79] : memref<8x1xf32, #tpu.memory_space<vmem>>, vector<8x1xf32>
    %101 = vector.broadcast %100 : vector<8x1xf32> to vector<8x256xf32>
    %102 = arith.addf %99, %101 : vector<8x256xf32>
    %cst_80 = arith.constant 0.000000e+00 : f32
    %103 = vector.broadcast %cst_80 : f32 to vector<8x256xf32>
    %104 = arith.maximumf %102, %103 : vector<8x256xf32>
    %c0_81 = arith.constant 0 : index
    %c0_82 = arith.constant 0 : index
    %105 = vector.load %arg7[%c0_81, %c0_82] : memref<8x256xf32, #tpu.memory_space<vmem>>, vector<8x256xf32>
    tpu.vector_store %arg7[%c0_81, %c0_82], %104 {strides = array<i32>} : memref<8x256xf32, #tpu.memory_space<vmem>>, vector<8x256xf32>,
    return
  }
  func.func @transform_0(%arg0: i32) -> (i32, i32) {
    %c0_i32 = arith.constant 0 : i32
    %c0_i32_0 = arith.constant 0 : i32
    return %c0_i32, %arg0 : i32, i32
  }
  func.func @transform_1(%arg0: i32) -> (i32, i32) {
    %c0_i32 = arith.constant 0 : i32
    %c0_i32_0 = arith.constant 0 : i32
    %c0_i32_1 = arith.constant 0 : i32
    return %c0_i32, %c0_i32_0 : i32, i32
  }
  func.func @transform_2(%arg0: i32) -> (i32, i32) {
    %c0_i32 = arith.constant 0 : i32
    %c0_i32_0 = arith.constant 0 : i32
    %c0_i32_1 = arith.constant 0 : i32
    return %c0_i32, %c0_i32_0 : i32, i32
  }
  func.func @transform_3(%arg0: i32) -> (i32, i32) {
    %c0_i32 = arith.constant 0 : i32
    %c0_i32_0 = arith.constant 0 : i32
    %c0_i32_1 = arith.constant 0 : i32
    return %c0_i32, %c0_i32_0 : i32, i32
  }
  func.func @transform_4(%arg0: i32) -> (i32, i32) {
    %c0_i32 = arith.constant 0 : i32
    %c0_i32_0 = arith.constant 0 : i32
    %c0_i32_1 = arith.constant 0 : i32
    return %c0_i32, %c0_i32_0 : i32, i32
  }
  func.func @transform_5(%arg0: i32) -> (i32, i32) {
    %c0_i32 = arith.constant 0 : i32
    %c0_i32_0 = arith.constant 0 : i32
    %c0_i32_1 = arith.constant 0 : i32
    return %c0_i32, %c0_i32_0 : i32, i32
  }
  func.func @transform_6(%arg0: i32) -> (i32, i32) {
    %c0_i32 = arith.constant 0 : i32
    %c0_i32_0 = arith.constant 0 : i32
    return %c0_i32, %arg0 : i32, i32
  }
}

</mosaic_0001>

<llo_original>
// kernel: tpu_custom_call.1
$region0: #{tpu_custom_call.1}
  #allocation0 [shape = 'u32[]', space=smem, size = 0x4, offset = 0x4, fixed_abs, tag = 'smem constant byte address 0x4 - core index']
  #allocation1 [shape = 'u32[144,128]{1,0:T(1,128)}', space=vmem, size = 0x12000, scoped, tag = 'internal scratch']
  #allocation2 [shape = 'f32[72,256]{1,0:T(8,128)}', space=vmem, size = 0x12000, scoped, tag = 'scratch operand']
  #allocation3 [shape = 'f32[72,256]{1,0:T(8,128)}', space=vmem, size = 0x12000, scoped, tag = 'scratch operand']
  %s0 = inlined_call_operand.hbm [shape: f32[8,512], index: 0, kind: input, shape index: {}]
  %s1 = inlined_call_operand.hbm [shape: f32[9,256], index: 1, kind: input, shape index: {}]
  %s2 = inlined_call_operand.vmem [shape: f32[8,72], index: 2, kind: input, shape index: {}]
  %s3 = inlined_call_operand.vmem [shape: f32[8,1], index: 3, kind: input, shape index: {}]
  %s4 = inlined_call_operand.vmem [shape: f32[8,72], index: 4, kind: input, shape index: {}]
  %s5 = inlined_call_operand.vmem [shape: f32[8,1], index: 5, kind: input, shape index: {}]
  %s6 = inlined_call_operand.hbm [shape: f32[8,512], index: 6, kind: output, shape index: {}]
  %s7 = sld [smem:[#allocation0]]
  $region65: #{tpu_custom_call.1} parent=0
    _
  %s9 = ssub.s32 1, %s7
  %s10 = scalar_select 0, %s9, %s7
  $region1: #{tpu_custom_call.1} parent=0
    #allocation4 [shape = 'u8[16384]{0}', space=vmem, size = 0x4000, scoped, tag = 'input window, operand 0']
    #allocation5 [shape = 's32[2]{0}', space=sflag, size = 0x8, scoped, tag = 'scoped memory for tpu_custom_call.1']
    #allocation6 [shape = 's32[2]{0}', space=sflag, size = 0x8, scoped, tag = 'scoped memory for tpu_custom_call.1']
    #allocation7 [shape = 'u8[16384]{0}', space=vmem, size = 0x4000, scoped, tag = 'input window, operand 1, single buffered']
    #allocation8 [shape = 's32[1]{0}', space=sflag, size = 0x4, scoped, tag = 'scoped memory for tpu_custom_call.1']
    #allocation9 [shape = 'u8[16384]{0}', space=vmem, size = 0x4000, scoped, tag = 'output window, operand 0']
    %11 = vsyncpa [#allocation5], 0
    %s12 = scalar_lea.sflag [#allocation5], 1
    %13 = vsyncpa %s12, 0
    %14 = vsyncpa [#allocation8], 0
    %15 = vsyncpa [#allocation6], 0
    %s16 = scalar_lea.sflag [#allocation6], 1
    %17 = vsyncpa %s16, 0
    loop: start=0, step=1, limit=4
    $region2: #{tpu_custom_call.1} parent=1 // loop_pre_header
      _
    $region3: #{tpu_custom_call.1} parent=1 // loop_header
      %s19 = sphi 0, %s23
      %p20 = scmp.ge.s32.totalorder %s19, 4
      %s29 = sphi 0, %s31
      %s32 = sphi 0, %s29
      %s33 = sphi 0, %s32
      %s49 = sphi 0, %s33
      %s53 = sphi 0, %s53
      %s55 = sphi 0, %s53
      %s56 = sphi 0, %s55
      %s70 = sphi 0, %s56
      %s74 = sphi 0, %s74
      %s76 = sphi 0, %s74
      %s77 = sphi 0, %s76
      %s91 = sphi 0, %s77
      %s95 = sphi 0, %s95
      %s97 = sphi 0, %s95
      %s98 = sphi 0, %s97
      %s112 = sphi 0, %s98
      %s116 = sphi 0, %s116
      %s118 = sphi 0, %s116
      %s119 = sphi 0, %s118
      %s133 = sphi 0, %s119
      %s137 = sphi 0, %s137
      %s139 = sphi 0, %s137
      %s140 = sphi 0, %s139
      %s154 = sphi 0, %s140
      %s160 = sphi 0, %s162
      %s163 = sphi 0, %s160
      %s164 = sphi 0, %s163
      %s180 = sphi 0, %s164
    $region4: #{tpu_custom_call.1} parent=1 // loop_header_branch
      %22 = sbr.rel (%p20) target = $region8
    $region5: #{tpu_custom_call.1} parent=1 // loop_body
      %s24 = ssub.s32 %s19, 1
      %s25 = ssub.s32 %s19, 2
      %s26 = sadd.s32 %s19, 1
      %s27 = ssub.s32 %s19, %s26
      %p28 = scmp.eq.s32.totalorder %s27, 0
      %s30 = sadd.s32 %s29, 1
      %s31 = scalar_select %p28, %s29, %s30
      %p34 = pneg %p28
      %p35 = scmp.eq.s32.totalorder %s19, 1
      %p36 = por %p34, %p35
      %p37 = scmp.ne.s32.totalorder %s29, %s32
      %p38 = scmp.eq.s32.totalorder %s19, 0
      %p39 = por %p37, %p38
      %p40 = scmp.ne.s32.totalorder %s29, %s32
      %p41 = scmp.eq.s32.totalorder %s24, 1
      %p42 = por %p40, %p41
      %p43 = scmp.ne.s32.totalorder %s32, %s33
      %p44 = scmp.eq.s32.totalorder %s24, 0
      %p45 = por %p43, %p44
      %p46 = scmp.ne.s32.totalorder %s32, %s33
      %p47 = scmp.eq.s32.totalorder %s25, 1
      %p48 = por %p46, %p47
      %p50 = scmp.ne.s32.totalorder %s33, %s49
      %p51 = scmp.eq.s32.totalorder %s25, 0
      %p52 = por %p50, %p51
      %s54 = sadd.s32 %s53, 1
      %p57 = scmp.eq.s32.totalorder %s19, 1
      %p58 = scmp.ne.s32.totalorder %s53, %s55
      %p59 = scmp.eq.s32.totalorder %s19, 0
      %p60 = por %p58, %p59
      %p61 = scmp.ne.s32.totalorder %s53, %s55
      %p62 = scmp.eq.s32.totalorder %s24, 1
      %p63 = por %p61, %p62
      %p64 = scmp.ne.s32.totalorder %s55, %s56
      %p65 = scmp.eq.s32.totalorder %s24, 0
      %p66 = por %p64, %p65
      %p67 = scmp.ne.s32.totalorder %s55, %s56
      %p68 = scmp.eq.s32.totalorder %s25, 1
      %p69 = por %p67, %p68
      %p71 = scmp.ne.s32.totalorder %s56, %s70
      %p72 = scmp.eq.s32.totalorder %s25, 0
      %p73 = por %p71, %p72
      %s75 = sadd.s32 %s74, 1
      %p78 = scmp.eq.s32.totalorder %s19, 1
      %p79 = scmp.ne.s32.totalorder %s74, %s76
      %p80 = scmp.eq.s32.totalorder %s19, 0
      %p81 = por %p79, %p80
      %p82 = scmp.ne.s32.totalorder %s74, %s76
      %p83 = scmp.eq.s32.totalorder %s24, 1
      %p84 = por %p82, %p83
      %p85 = scmp.ne.s32.totalorder %s76, %s77
      %p86 = scmp.eq.s32.totalorder %s24, 0
      %p87 = por %p85, %p86
      %p88 = scmp.ne.s32.totalorder %s76, %s77
      %p89 = scmp.eq.s32.totalorder %s25, 1
      %p90 = por %p88, %p89
      %p92 = scmp.ne.s32.totalorder %s77, %s91
      %p93 = scmp.eq.s32.totalorder %s25, 0
      %p94 = por %p92, %p93
      %s96 = sadd.s32 %s95, 1
      %p99 = scmp.eq.s32.totalorder %s19, 1
      %p100 = scmp.ne.s32.totalorder %s95, %s97
      %p101 = scmp.eq.s32.totalorder %s19, 0
      %p102 = por %p100, %p101
      %p103 = scmp.ne.s32.totalorder %s95, %s97
      %p104 = scmp.eq.s32.totalorder %s24, 1
      %p105 = por %p103, %p104
      %p106 = scmp.ne.s32.totalorder %s97, %s98
      %p107 = scmp.eq.s32.totalorder %s24, 0
      %p108 = por %p106, %p107
      %p109 = scmp.ne.s32.totalorder %s97, %s98
      %p110 = scmp.eq.s32.totalorder %s25, 1
      %p111 = por %p109, %p110
      %p113 = scmp.ne.s32.totalorder %s98, %s112
      %p114 = scmp.eq.s32.totalorder %s25, 0
      %p115 = por %p113, %p114
      %s117 = sadd.s32 %s116, 1
      %p120 = scmp.eq.s32.totalorder %s19, 1
      %p121 = scmp.ne.s32.totalorder %s116, %s118
      %p122 = scmp.eq.s32.totalorder %s19, 0
      %p123 = por %p121, %p122
      %p124 = scmp.ne.s32.totalorder %s116, %s118
      %p125 = scmp.eq.s32.totalorder %s24, 1
      %p126 = por %p124, %p125
      %p127 = scmp.ne.s32.totalorder %s118, %s119
      %p128 = scmp.eq.s32.totalorder %s24, 0
      %p129 = por %p127, %p128
      %p130 = scmp.ne.s32.totalorder %s118, %s119
      %p131 = scmp.eq.s32.totalorder %s25, 1
      %p132 = por %p130, %p131
      %p134 = scmp.ne.s32.totalorder %s119, %s133
      %p135 = scmp.eq.s32.totalorder %s25, 0
      %p136 = por %p134, %p135
      %s138 = sadd.s32 %s137, 1
      %p141 = scmp.eq.s32.totalorder %s19, 1
      %p142 = scmp.ne.s32.totalorder %s137, %s139
      %p143 = scmp.eq.s32.totalorder %s19, 0
      %p144 = por %p142, %p143
      %p145 = scmp.ne.s32.totalorder %s137, %s139
      %p146 = scmp.eq.s32.totalorder %s24, 1
      %p147 = por %p145, %p146
      %p148 = scmp.ne.s32.totalorder %s139, %s140
      %p149 = scmp.eq.s32.totalorder %s24, 0
      %p150 = por %p148, %p149
      %p151 = scmp.ne.s32.totalorder %s139, %s140
      %p152 = scmp.eq.s32.totalorder %s25, 1
      %p153 = por %p151, %p152
      %p155 = scmp.ne.s32.totalorder %s140, %s154
      %p156 = scmp.eq.s32.totalorder %s25, 0
      %p157 = por %p155, %p156
      %s158 = ssub.s32 %s19, %s26
      %p159 = scmp.eq.s32.totalorder %s158, 0
      %s161 = sadd.s32 %s160, 1
      %s162 = scalar_select %p159, %s160, %s161
      %p165 = pneg %p159
      %p166 = scmp.eq.s32.totalorder %s19, 1
      %p167 = por %p165, %p166
      %p168 = scmp.ne.s32.totalorder %s160, %s163
      %p169 = scmp.eq.s32.totalorder %s19, 0
      %p170 = por %p168, %p169
      %p171 = scmp.ne.s32.totalorder %s160, %s163
      %p172 = scmp.eq.s32.totalorder %s24, 1
      %p173 = por %p171, %p172
      %p174 = scmp.ne.s32.totalorder %s163, %s164
      %p175 = scmp.eq.s32.totalorder %s24, 0
      %p176 = por %p174, %p175
      %p177 = scmp.ne.s32.totalorder %s163, %s164
      %p178 = scmp.eq.s32.totalorder %s25, 1
      %p179 = por %p177, %p178
      %p181 = scmp.ne.s32.totalorder %s164, %s180
      %p182 = scmp.eq.s32.totalorder %s25, 0
      %p183 = por %p181, %p182
      %p184 = scmp.le.s32.totalorder 1, %s19
      %p185 = scmp.lt.s32.totalorder %s19, 3
      %p186 = pnand %p184, %p185
      %p187 = pneg %p186
      // Predicated region
      $region9: #{tpu_custom_call.1} parent=5 // pred_check
        _
      $region10: #{tpu_custom_call.1} parent=5 // pred_check_branch
        %189 = sbr.rel (%p186) target = $region12
      $region11: #{tpu_custom_call.1} parent=5 // pred_region
        %s190 = ssub.s32 %s19, 1
        // Predicated region
        $region13: #{tpu_custom_call.1} parent=11 // pred_check
          %p191 = pneg %p66
        $region14: #{tpu_custom_call.1} parent=11 // pred_check_branch
          %193 = sbr.rel (%p191) target = $region16
        $region15: #{tpu_custom_call.1} parent=11 // pred_region
          %s195 = ssub.s32 512, 512
          %196 = vsyncadd [#allocation8], %s195
          %s197 = sshll.u32 [#allocation7], 4
          %s198 = int_to_ptr.vmem [resolvable:$true] %s197
          %203 = dma.hbm_to_vmem [thread:$0]  %s1, 512, %s198, [#allocation8], 256, 256, 16
        $region16: #{tpu_custom_call.1} parent=11 // pred_fallthru
          _
        // Predicated region
        $region17: #{tpu_custom_call.1} parent=11 // pred_check
          %p204 = pneg %p87
        $region18: #{tpu_custom_call.1} parent=11 // pred_check_branch
          %206 = sbr.rel (%p204) target = $region20
        $region19: #{tpu_custom_call.1} parent=11 // pred_region
          _
        $region20: #{tpu_custom_call.1} parent=11 // pred_fallthru
          _
        // Predicated region
        $region21: #{tpu_custom_call.1} parent=11 // pred_check
          %p207 = pneg %p108
        $region22: #{tpu_custom_call.1} parent=11 // pred_check_branch
          %209 = sbr.rel (%p207) target = $region24
        $region23: #{tpu_custom_call.1} parent=11 // pred_region
          _
        $region24: #{tpu_custom_call.1} parent=11 // pred_fallthru
          _
        // Predicated region
        $region25: #{tpu_custom_call.1} parent=11 // pred_check
          %p210 = pneg %p129
        $region26: #{tpu_custom_call.1} parent=11 // pred_check_branch
          %212 = sbr.rel (%p210) target = $region28
        $region27: #{tpu_custom_call.1} parent=11 // pred_region
          _
        $region28: #{tpu_custom_call.1} parent=11 // pred_fallthru
          _
        // Predicated region
        $region29: #{tpu_custom_call.1} parent=11 // pred_check
          %p213 = pneg %p150
        $region30: #{tpu_custom_call.1} parent=11 // pred_check_branch
          %215 = sbr.rel (%p213) target = $region32
        $region31: #{tpu_custom_call.1} parent=11 // pred_region
          _
        $region32: #{tpu_custom_call.1} parent=11 // pred_fallthru
          _
      $region12: #{tpu_custom_call.1} parent=5 // pred_fallthru
        _
      %p216 = scmp.lt.s32.totalorder %s19, 2
      // Predicated region
      $region33: #{tpu_custom_call.1} parent=5 // pred_check
        %p217 = pneg %p216
      $region34: #{tpu_custom_call.1} parent=5 // pred_check_branch
        %219 = sbr.rel (%p217) target = $region36
      $region35: #{tpu_custom_call.1} parent=5 // pred_region
        // Predicated region
        $region37: #{tpu_custom_call.1} parent=35 // pred_check
          %p220 = pneg %p39
        $region38: #{tpu_custom_call.1} parent=35 // pred_check_branch
          %222 = sbr.rel (%p220) target = $region40
        $region39: #{tpu_custom_call.1} parent=35 // pred_region
          %s223 = sand.u32 %s29, 1
          %s224 = scalar_lea.sflag [#allocation5], %s223
          %s225 = sand.u32 %s29, 1
          %s226 = smul.addr %s225, 16
          %s227 = scalar_lea.vmem [#allocation4], %s226
          %s228 = smul.u32 2, %s19
          %s230 = ssub.s32 256, 256
          %231 = vsyncadd %s224, %s230
          %s232 = smul.addr %s228, 128
          %s233 = scalar_lea.hbm %s0, %s232
          %s235 = sshll.u32 %s227, 4
          %s236 = int_to_ptr.vmem [resolvable:$true] %s235
          %238 = dma.hbm_to_vmem [thread:$0]  %s233, 256, %s236, %s224
        $region40: #{tpu_custom_call.1} parent=35 // pred_fallthru
          _
      $region36: #{tpu_custom_call.1} parent=5 // pred_fallthru
        _
      %p239 = scmp.le.s32.totalorder 1, %s19
      %p240 = scmp.lt.s32.totalorder %s19, 3
      %p241 = pnand %p239, %p240
      %p242 = pneg %p241
      // Predicated region
      $region41: #{tpu_custom_call.1} parent=5 // pred_check
        _
      $region42: #{tpu_custom_call.1} parent=5 // pred_check_branch
        %244 = sbr.rel (%p241) target = $region44
      $region43: #{tpu_custom_call.1} parent=5 // pred_region
        %s245 = ssub.s32 %s19, 1
        %s246 = sand.u32 %s32, 1
        %s247 = scalar_lea.sflag [#allocation5], %s246
        %s248 = sand.u32 %s32, 1
        %s249 = smul.addr %s248, 16
        %s250 = scalar_lea.vmem [#allocation4], %s249
        // Predicated region
        $region45: #{tpu_custom_call.1} parent=43 // pred_check
          %p251 = pneg %p45
        $region46: #{tpu_custom_call.1} parent=43 // pred_check_branch
          %253 = sbr.rel (%p251) target = $region48
        $region47: #{tpu_custom_call.1} parent=43 // pred_region
          %254 = dma.done %s247, 256
        $region48: #{tpu_custom_call.1} parent=43 // pred_fallthru
          _
        // Predicated region
        $region49: #{tpu_custom_call.1} parent=43 // pred_check
          %p255 = pneg %p66
        $region50: #{tpu_custom_call.1} parent=43 // pred_check_branch
          %257 = sbr.rel (%p255) target = $region52
        $region51: #{tpu_custom_call.1} parent=43 // pred_region
          %258 = dma.done [#allocation8], 512
        $region52: #{tpu_custom_call.1} parent=43 // pred_fallthru
          _
        %s259 = sand.u32 %s32, 1
        %s260 = scalar_lea.sflag [#allocation5], %s259
        %s261 = sand.u32 %s32, 1
        %s262 = smul.addr %s261, 16
        %s263 = scalar_lea.vmem [#allocation4], %s262
        %p264 = pneg %p45
        %p265 = pneg %p42
        %p266 = pneg %p66
        %p267 = pneg %p63
        %p268 = pneg %p87
        %p269 = pneg %p84
        %p270 = pneg %p108
        %p271 = pneg %p105
        %p272 = pneg %p129
        %p273 = pneg %p126
        %p274 = pneg %p150
        %p275 = pneg %p147
        %p276 = pneg %p176
        %p277 = pneg %p173
        %s278 = sand.u32 %s163, 1
        %s279 = scalar_lea.sflag [#allocation6], %s278
        %s280 = sand.u32 %s163, 1
        %s281 = smul.addr %s280, 16
        %s282 = scalar_lea.vmem [#allocation9], %s281
        %s283 = smul.u32 2, %s24
        %s284 = smul.u32 2, %s24
        %v285 = vld [vmem:[%s250] sm:$0xff]
        %v286 = vld [vmem:[%s250 + $0x8] sm:$0xff]
        %287 = vrot.lane.b32.xlu0 %v285, 17
        %v288 = vpop.permute.xlu0 %287
        %289 = vrot.lane.b32.xlu0 %v286, 17
        %v290 = vpop.permute.xlu0 %289
        %v291 = vlaneseq
        %v292 = vand.u32 %v291, 127
        %vm293 = vcmp.lt.s32.totalorder %v292, 17
        %v294 = vsel %vm293, %v288, %v290
        %v295 = vsel %vm293, %v290, %v288
        %v296 = vld [vmem:[#allocation7] ss:$8 sm:$0x3]
        %v298 = vlaneseq
        %v299 = vshrl.u32 %v298, 7
        %v300 = vsub.s32 0, %v299
        %v301 = vrot.slane %v296, %v300
        %v302 = vlaneseq
        %v303 = vshrl.u32 %v302, 7
        %v304 = vsub.s32 1, %v303
        %v305 = vrot.slane %v296, %v304
        %v308 = vmul.f32 %v295, %v301
        %v309 = vmul.f32 %v294, %v305
        %310 = vst [vmem:[#allocation2] sm:$0xff] %v308
        %311 = vst [vmem:[#allocation2 + $0x8] sm:$0xff] %v309
        %312 = vrot.lane.b32.xlu0 %v285, 16
        %v313 = vpop.permute.xlu0 %312
        %314 = vrot.lane.b32.xlu0 %v286, 16
        %v315 = vpop.permute.xlu0 %314
        %vm316 = vcmp.lt.s32.totalorder %v292, 16
        %v317 = vsel %vm316, %v313, %v315
        %v318 = vsel %vm316, %v315, %v313
        %s319 = scalar_lea.vmem [#allocation7], 1
        %v320 = vld [vmem:[%s319] ss:$8 sm:$0x3]
        %v322 = vlaneseq
        %v323 = vshrl.u32 %v322, 7
        %v324 = vsub.s32 0, %v323
        %v325 = vrot.slane %v320, %v324
        %v326 = vlaneseq
        %v327 = vshrl.u32 %v326, 7
        %v328 = vsub.s32 1, %v327
        %v329 = vrot.slane %v320, %v328
        %v332 = vmul.f32 %v318, %v325
        %v333 = vmul.f32 %v317, %v329
        %334 = vst [vmem:[#allocation2 + $0x10] sm:$0xff] %v332
        %335 = vst [vmem:[#allocation2 + $0x18] sm:$0xff] %v333
        %336 = vrot.lane.b32.xlu0 %v285, 15
        %v337 = vpop.permute.xlu0 %336
        %338 = vrot.lane.b32.xlu0 %v286, 15
        %v339 = vpop.permute.xlu0 %338
        %vm340 = vcmp.lt.s32.totalorder %v292, 15
        %v341 = vsel %vm340, %v337, %v339
        %v342 = vsel %vm340, %v339, %v337
        %s343 = scalar_lea.vmem [#allocation7], 2
        %v344 = vld [vmem:[%s343] ss:$8 sm:$0x3]
        %v346 = vlaneseq
        %v347 = vshrl.u32 %v346, 7
        %v348 = vsub.s32 0, %v347
        %v349 = vrot.slane %v344, %v348
        %v350 = vlaneseq
        %v351 = vshrl.u32 %v350, 7
        %v352 = vsub.s32 1, %v351
        %v353 = vrot.slane %v344, %v352
        %v356 = vmul.f32 %v342, %v349
        %v357 = vmul.f32 %v341, %v353
        %358 = vst [vmem:[#allocation2 + $0x20] sm:$0xff] %v356
        %359 = vst [vmem:[#allocation2 + $0x28] sm:$0xff] %v357
        %360 = vrot.lane.b32.xlu0 %v285, 1
        %v361 = vpop.permute.xlu0 %360
        %362 = vrot.lane.b32.xlu0 %v286, 1
        %v363 = vpop.permute.xlu0 %362
        %vm364 = vcmp.lt.s32.totalorder %v292, 1
        %v365 = vsel %vm364, %v361, %v363
        %v366 = vsel %vm364, %v363, %v361
        %s367 = scalar_lea.vmem [#allocation7], 3
        %v368 = vld [vmem:[%s367] ss:$8 sm:$0x3]
        %v370 = vlaneseq
        %v371 = vshrl.u32 %v370, 7
        %v372 = vsub.s32 0, %v371
        %v373 = vrot.slane %v368, %v372
        %v374 = vlaneseq
        %v375 = vshrl.u32 %v374, 7
        %v376 = vsub.s32 1, %v375
        %v377 = vrot.slane %v368, %v376
        %v380 = vmul.f32 %v366, %v373
        %v381 = vmul.f32 %v365, %v377
        %382 = vst [vmem:[#allocation2 + $0x30] sm:$0xff] %v380
        %383 = vst [vmem:[#allocation2 + $0x38] sm:$0xff] %v381
        %s384 = scalar_lea.vmem [#allocation7], 4
        %v385 = vld [vmem:[%s384] ss:$8 sm:$0x3]
        %v387 = vlaneseq
        %v388 = vshrl.u32 %v387, 7
        %v389 = vsub.s32 0, %v388
        %v390 = vrot.slane %v385, %v389
        %v391 = vlaneseq
        %v392 = vshrl.u32 %v391, 7
        %v393 = vsub.s32 1, %v392
        %v394 = vrot.slane %v385, %v393
        %v397 = vmul.f32 %v285, %v390
        %v398 = vmul.f32 %v286, %v394
        %399 = vst [vmem:[#allocation2 + $0x40] sm:$0xff] %v397
        %400 = vst [vmem:[#allocation2 + $0x48] sm:$0xff] %v398
        %401 = vrot.lane.b32.xlu0 %v285, 127
        %v402 = vpop.permute.xlu0 %401
        %403 = vrot.lane.b32.xlu0 %v286, 127
        %v404 = vpop.permute.xlu0 %403
        %vm405 = vcmp.lt.s32.totalorder %v292, 127
        %v406 = vsel %vm405, %v402, %v404
        %v407 = vsel %vm405, %v404, %v402
        %s408 = scalar_lea.vmem [#allocation7], 5
        %v409 = vld [vmem:[%s408] ss:$8 sm:$0x3]
        %v411 = vlaneseq
        %v412 = vshrl.u32 %v411, 7
        %v413 = vsub.s32 0, %v412
        %v414 = vrot.slane %v409, %v413
        %v415 = vlaneseq
        %v416 = vshrl.u32 %v415, 7
        %v417 = vsub.s32 1, %v416
        %v418 = vrot.slane %v409, %v417
        %v421 = vmul.f32 %v406, %v414
        %v422 = vmul.f32 %v407, %v418
        %423 = vst [vmem:[#allocation2 + $0x50] sm:$0xff] %v421
        %424 = vst [vmem:[#allocation2 + $0x58] sm:$0xff] %v422
        %425 = vrot.lane.b32.xlu0 %v285, 113
        %v426 = vpop.permute.xlu0 %425
        %427 = vrot.lane.b32.xlu0 %v286, 113
        %v428 = vpop.permute.xlu0 %427
        %vm429 = vcmp.lt.s32.totalorder %v292, 113
        %v430 = vsel %vm429, %v426, %v428
        %v431 = vsel %vm429, %v428, %v426
        %s432 = scalar_lea.vmem [#allocation7], 6
        %v433 = vld [vmem:[%s432] ss:$8 sm:$0x3]
        %v435 = vlaneseq
        %v436 = vshrl.u32 %v435, 7
        %v437 = vsub.s32 0, %v436
        %v438 = vrot.slane %v433, %v437
        %v439 = vlaneseq
        %v440 = vshrl.u32 %v439, 7
        %v441 = vsub.s32 1, %v440
        %v442 = vrot.slane %v433, %v441
        %v445 = vmul.f32 %v430, %v438
        %v446 = vmul.f32 %v431, %v442
        %447 = vst [vmem:[#allocation2 + $0x60] sm:$0xff] %v445
        %448 = vst [vmem:[#allocation2 + $0x68] sm:$0xff] %v446
        %449 = vrot.lane.b32.xlu0 %v285, 112
        %v450 = vpop.permute.xlu0 %449
        %451 = vrot.lane.b32.xlu0 %v286, 112
        %v452 = vpop.permute.xlu0 %451
        %vm453 = vcmp.lt.s32.totalorder %v292, 112
        %v454 = vsel %vm453, %v450, %v452
        %v455 = vsel %vm453, %v452, %v450
        %s456 = scalar_lea.vmem [#allocation7], 7
        %v457 = vld [vmem:[%s456] ss:$8 sm:$0x3]
        %v459 = vlaneseq
        %v460 = vshrl.u32 %v459, 7
        %v461 = vsub.s32 0, %v460
        %v462 = vrot.slane %v457, %v461
        %v463 = vlaneseq
        %v464 = vshrl.u32 %v463, 7
        %v465 = vsub.s32 1, %v464
        %v466 = vrot.slane %v457, %v465
        %v469 = vmul.f32 %v454, %v462
        %v470 = vmul.f32 %v455, %v466
        %471 = vst [vmem:[#allocation2 + $0x70] sm:$0xff] %v469
        %472 = vst [vmem:[#allocation2 + $0x78] sm:$0xff] %v470
        %473 = vrot.lane.b32.xlu0 %v285, 111
        %v474 = vpop.permute.xlu0 %473
        %475 = vrot.lane.b32.xlu0 %v286, 111
        %v476 = vpop.permute.xlu0 %475
        %vm477 = vcmp.lt.s32.totalorder %v292, 111
        %v478 = vsel %vm477, %v474, %v476
        %v479 = vsel %vm477, %v476, %v474
        %s480 = scalar_lea.vmem [#allocation7], 16
        %v481 = vld [vmem:[%s480] ss:$8 sm:$0x3]
        %v483 = vlaneseq
        %v484 = vshrl.u32 %v483, 7
        %v485 = vsub.s32 0, %v484
        %v486 = vrot.slane %v481, %v485
        %v487 = vlaneseq
        %v488 = vshrl.u32 %v487, 7
        %v489 = vsub.s32 1, %v488
        %v490 = vrot.slane %v481, %v489
        %v493 = vmul.f32 %v478, %v486
        %v494 = vmul.f32 %v479, %v490
        %495 = vst [vmem:[#allocation2 + $0x80] sm:$0xff] %v493
        %496 = vst [vmem:[#allocation2 + $0x88] sm:$0xff] %v494
        %v497 = vld [vmem:[%s2] sm:$0xff]
        %v498 = vld [vmem:[#allocation2] sm:$0xff]
        %v499 = vld [vmem:[#allocation2 + $0x8] sm:$0xff]
        %v500 = vld [vmem:[#allocation2 + $0x10] sm:$0xff]
        %v501 = vld [vmem:[#allocation2 + $0x18] sm:$0xff]
        %v502 = vld [vmem:[#allocation2 + $0x20] sm:$0xff]
        %v503 = vld [vmem:[#allocation2 + $0x28] sm:$0xff]
        %v504 = vld [vmem:[#allocation2 + $0x30] sm:$0xff]
        %v505 = vld [vmem:[#allocation2 + $0x38] sm:$0xff]
        %v506 = vld [vmem:[#allocation2 + $0x40] sm:$0xff]
        %v507 = vld [vmem:[#allocation2 + $0x48] sm:$0xff]
        %v508 = vld [vmem:[#allocation2 + $0x50] sm:$0xff]
        %v509 = vld [vmem:[#allocation2 + $0x58] sm:$0xff]
        %v510 = vld [vmem:[#allocation2 + $0x60] sm:$0xff]
        %v511 = vld [vmem:[#allocation2 + $0x68] sm:$0xff]
        %v512 = vld [vmem:[#allocation2 + $0x70] sm:$0xff]
        %v513 = vld [vmem:[#allocation2 + $0x78] sm:$0xff]
        %v514 = vld [vmem:[#allocation2 + $0x80] sm:$0xff]
        %v515 = vld [vmem:[#allocation2 + $0x88] sm:$0xff]
        %v516 = vld [vmem:[%s3] sm:$0xff]
        %518 = vset.pattern.permute.xlu0 0
        %519 = vperm.xlu0 %518, %v516
        %v520 = vpop.permute.xlu0 %519
        %vm522 = vcmask 588800
        %v524 = vsel %vm522, %v497, 0
        %526 = vmatprep.subr.mxu0 %v499
        %527 = vmatpush1.msra.mxu0 %v498
        %528 = vmatprep.subr.mxu0 %v501
        %529 = vmatpush1.msra.mxu0 %v500
        %530 = vmatprep.subr.mxu0 %v503
        %531 = vmatpush1.msra.mxu0 %v502
        %532 = vmatprep.subr.mxu0 %v505
        %533 = vmatpush1.msra.mxu0 %v504
        %534 = vmatprep.subr.mxu0 %v507
        %535 = vmatpush1.msra.mxu0 %v506
        %536 = vmatprep.subr.mxu0 %v509
        %537 = vmatpush1.msra.mxu0 %v508
        %538 = vmatprep.subr.mxu0 %v511
        %539 = vmatpush1.msra.mxu0 %v510
        %540 = vmatprep.subr.mxu0 %v513
        %541 = vmatpush1.msra.mxu0 %v512
        %542 = vmatprep.subr.mxu0 %v515
        %543 = vmatpush1.msra.mxu0 %v514
        %544 = vmatprep.subr.mxu0 0.0
        %545 = vmatpush1.msra.mxu0 0.0
        %546 = vmatprep.subr.mxu0 0.0
        %547 = vmatpush1.msra.mxu0 0.0
        %548 = vmatprep.subr.mxu0 0.0
        %549 = vmatpush1.msra.mxu0 0.0
        %550 = vmatprep.subr.mxu0 0.0
        %551 = vmatpush1.msra.mxu0 0.0
        %552 = vmatprep.subr.mxu0 0.0
        %553 = vmatpush1.msra.mxu0 0.0
        %554 = vmatprep.subr.mxu0 0.0
        %555 = vmatpush1.msra.mxu0 0.0
        %556 = vmatprep.subr.mxu0 0.0
        %557 = vmatpush1.msra.mxu0 0.0
        %558 = vmatprep.subr.mxu0 0.0
        %559 = vmatpush1.msra.mxu0 0.0
        %560 = vmatprep.subr.mxu0 0.0
        %561 = vmatpush1.msra.mxu0 0.0
        %562 = vmatprep.subr.mxu0 0.0
        %563 = vmatpush1.msra.mxu0 0.0
        %564 = vmatprep.subr.mxu0 0.0
        %565 = vmatpush1.msra.mxu0 0.0
        %566 = vmatprep.subr.mxu0 0.0
        %567 = vmatpush1.msra.mxu0 0.0
        %568 = vmatprep.subr.mxu0 0.0
        %569 = vmatpush1.msra.mxu0 0.0
        %570 = vmatprep.subr.mxu0 0.0
        %571 = vmatpush1.msra.mxu0 0.0
        %572 = vmatprep.subr.mxu0 0.0
        %573 = vmatpush1.msra.mxu0 0.0
        %574 = vmatprep.subr.mxu0 0.0
        %575 = vmatpush1.msra.mxu0 0.0
        %576 = vmatprep.subr.mxu0 0.0
        %577 = vmatpush1.msra.mxu0 0.0
        %578 = vmatprep.subr.mxu0 0.0
        %579 = vmatpush1.msra.mxu0 0.0
        %580 = vmatprep.subr.mxu0 0.0
        %581 = vmatpush1.msra.mxu0 0.0
        %582 = vmatprep.subr.mxu0 0.0
        %583 = vmatpush1.msra.mxu0 0.0
        %584 = vmatprep.subr.mxu0 0.0
        %585 = vmatpush1.msra.mxu0 0.0
        %586 = vmatprep.subr.mxu0 0.0
        %587 = vmatpush1.msra.mxu0 0.0
        %588 = vmatprep.subr.mxu0 0.0
        %589 = vmatpush1.msra.mxu0 0.0
        %590 = vmatprep.mubr.f32.mxu0 0.0
        %591 = vmatmul.mubr.f32.gmra.mrb[0].mxu0 %v524
        %v592 = vpop.f32.mrb[0].mxu0
        %v593 = vadd.f32 %v520, %v592
        %v594 = vpop.f32.mrb[0].mxu0
        %v595 = vadd.f32 %v520, %v594
        %596 = vdwg.mxu0
        %v597 = vmax.f32 %v593, 0.0
        %v598 = vmax.f32 %v595, 0.0
        %599 = vrot.lane.b32.xlu0 %v597, 17
        %v600 = vpop.permute.xlu0 %599
        %601 = vrot.lane.b32.xlu0 %v598, 17
        %v602 = vpop.permute.xlu0 %601
        %v603 = vsel %vm293, %v600, %v602
        %v604 = vsel %vm293, %v602, %v600
        %v605 = vld [vmem:[#allocation7] ss:$8 sm:$0x3]
        %v607 = vlaneseq
        %v608 = vshrl.u32 %v607, 7
        %v609 = vsub.s32 0, %v608
        %v610 = vrot.slane %v605, %v609
        %v611 = vlaneseq
        %v612 = vshrl.u32 %v611, 7
        %v613 = vsub.s32 1, %v612
        %v614 = vrot.slane %v605, %v613
        %v617 = vmul.f32 %v604, %v610
        %v618 = vmul.f32 %v603, %v614
        %619 = vst [vmem:[#allocation3] sm:$0xff] %v617
        %620 = vst [vmem:[#allocation3 + $0x8] sm:$0xff] %v618
        %621 = vrot.lane.b32.xlu0 %v597, 16
        %v622 = vpop.permute.xlu0 %621
        %623 = vrot.lane.b32.xlu0 %v598, 16
        %v624 = vpop.permute.xlu0 %623
        %v625 = vsel %vm316, %v622, %v624
        %v626 = vsel %vm316, %v624, %v622
        %v627 = vld [vmem:[%s319] ss:$8 sm:$0x3]
        %v629 = vlaneseq
        %v630 = vshrl.u32 %v629, 7
        %v631 = vsub.s32 0, %v630
        %v632 = vrot.slane %v627, %v631
        %v633 = vlaneseq
        %v634 = vshrl.u32 %v633, 7
        %v635 = vsub.s32 1, %v634
        %v636 = vrot.slane %v627, %v635
        %v639 = vmul.f32 %v626, %v632
        %v640 = vmul.f32 %v625, %v636
        %641 = vst [vmem:[#allocation3 + $0x10] sm:$0xff] %v639
        %642 = vst [vmem:[#allocation3 + $0x18] sm:$0xff] %v640
        %643 = vrot.lane.b32.xlu0 %v597, 15
        %v644 = vpop.permute.xlu0 %643
        %645 = vrot.lane.b32.xlu0 %v598, 15
        %v646 = vpop.permute.xlu0 %645
        %v647 = vsel %vm340, %v644, %v646
        %v648 = vsel %vm340, %v646, %v644
        %v649 = vld [vmem:[%s343] ss:$8 sm:$0x3]
        %v651 = vlaneseq
        %v652 = vshrl.u32 %v651, 7
        %v653 = vsub.s32 0, %v652
        %v654 = vrot.slane %v649, %v653
        %v655 = vlaneseq
        %v656 = vshrl.u32 %v655, 7
        %v657 = vsub.s32 1, %v656
        %v658 = vrot.slane %v649, %v657
        %v661 = vmul.f32 %v648, %v654
        %v662 = vmul.f32 %v647, %v658
        %663 = vst [vmem:[#allocation3 + $0x20] sm:$0xff] %v661
        %664 = vst [vmem:[#allocation3 + $0x28] sm:$0xff] %v662
        %665 = vrot.lane.b32.xlu0 %v597, 1
        %v666 = vpop.permute.xlu0 %665
        %667 = vrot.lane.b32.xlu0 %v598, 1
        %v668 = vpop.permute.xlu0 %667
        %v669 = vsel %vm364, %v666, %v668
        %v670 = vsel %vm364, %v668, %v666
        %v671 = vld [vmem:[%s367] ss:$8 sm:$0x3]
        %v673 = vlaneseq
        %v674 = vshrl.u32 %v673, 7
        %v675 = vsub.s32 0, %v674
        %v676 = vrot.slane %v671, %v675
        %v677 = vlaneseq
        %v678 = vshrl.u32 %v677, 7
        %v679 = vsub.s32 1, %v678
        %v680 = vrot.slane %v671, %v679
        %v683 = vmul.f32 %v670, %v676
        %v684 = vmul.f32 %v669, %v680
        %685 = vst [vmem:[#allocation3 + $0x30] sm:$0xff] %v683
        %686 = vst [vmem:[#allocation3 + $0x38] sm:$0xff] %v684
        %v687 = vld [vmem:[%s384] ss:$8 sm:$0x3]
        %v689 = vlaneseq
        %v690 = vshrl.u32 %v689, 7
        %v691 = vsub.s32 0, %v690
        %v692 = vrot.slane %v687, %v691
        %v693 = vlaneseq
        %v694 = vshrl.u32 %v693, 7
        %v695 = vsub.s32 1, %v694
        %v696 = vrot.slane %v687, %v695
        %v699 = vmul.f32 %v597, %v692
        %v700 = vmul.f32 %v598, %v696
        %701 = vst [vmem:[#allocation3 + $0x40] sm:$0xff] %v699
        %702 = vst [vmem:[#allocation3 + $0x48] sm:$0xff] %v700
        %703 = vrot.lane.b32.xlu0 %v597, 127
        %v704 = vpop.permute.xlu0 %703
        %705 = vrot.lane.b32.xlu0 %v598, 127
        %v706 = vpop.permute.xlu0 %705
        %v707 = vsel %vm405, %v704, %v706
        %v708 = vsel %vm405, %v706, %v704
        %v709 = vld [vmem:[%s408] ss:$8 sm:$0x3]
        %v711 = vlaneseq
        %v712 = vshrl.u32 %v711, 7
        %v713 = vsub.s32 0, %v712
        %v714 = vrot.slane %v709, %v713
        %v715 = vlaneseq
        %v716 = vshrl.u32 %v715, 7
        %v717 = vsub.s32 1, %v716
        %v718 = vrot.slane %v709, %v717
        %v721 = vmul.f32 %v707, %v714
        %v722 = vmul.f32 %v708, %v718
        %723 = vst [vmem:[#allocation3 + $0x50] sm:$0xff] %v721
        %724 = vst [vmem:[#allocation3 + $0x58] sm:$0xff] %v722
        %725 = vrot.lane.b32.xlu0 %v597, 113
        %v726 = vpop.permute.xlu0 %725
        %727 = vrot.lane.b32.xlu0 %v598, 113
        %v728 = vpop.permute.xlu0 %727
        %v729 = vsel %vm429, %v726, %v728
        %v730 = vsel %vm429, %v728, %v726
        %v731 = vld [vmem:[%s432] ss:$8 sm:$0x3]
        %v733 = vlaneseq
        %v734 = vshrl.u32 %v733, 7
        %v735 = vsub.s32 0, %v734
        %v736 = vrot.slane %v731, %v735
        %v737 = vlaneseq
        %v738 = vshrl.u32 %v737, 7
        %v739 = vsub.s32 1, %v738
        %v740 = vrot.slane %v731, %v739
        %v743 = vmul.f32 %v729, %v736
        %v744 = vmul.f32 %v730, %v740
        %745 = vst [vmem:[#allocation3 + $0x60] sm:$0xff] %v743
        %746 = vst [vmem:[#allocation3 + $0x68] sm:$0xff] %v744
        %747 = vrot.lane.b32.xlu0 %v597, 112
        %v748 = vpop.permute.xlu0 %747
        %749 = vrot.lane.b32.xlu0 %v598, 112
        %v750 = vpop.permute.xlu0 %749
        %v751 = vsel %vm453, %v748, %v750
        %v752 = vsel %vm453, %v750, %v748
        %v753 = vld [vmem:[%s456] ss:$8 sm:$0x3]
        %v755 = vlaneseq
        %v756 = vshrl.u32 %v755, 7
        %v757 = vsub.s32 0, %v756
        %v758 = vrot.slane %v753, %v757
        %v759 = vlaneseq
        %v760 = vshrl.u32 %v759, 7
        %v761 = vsub.s32 1, %v760
        %v762 = vrot.slane %v753, %v761
        %v765 = vmul.f32 %v751, %v758
        %v766 = vmul.f32 %v752, %v762
        %767 = vst [vmem:[#allocation3 + $0x70] sm:$0xff] %v765
        %768 = vst [vmem:[#allocation3 + $0x78] sm:$0xff] %v766
        %769 = vrot.lane.b32.xlu0 %v597, 111
        %v770 = vpop.permute.xlu0 %769
        %771 = vrot.lane.b32.xlu0 %v598, 111
        %v772 = vpop.permute.xlu0 %771
        %v773 = vsel %vm477, %v770, %v772
        %v774 = vsel %vm477, %v772, %v770
        %v775 = vld [vmem:[%s480] ss:$8 sm:$0x3]
        %v777 = vlaneseq
        %v778 = vshrl.u32 %v777, 7
        %v779 = vsub.s32 0, %v778
        %v780 = vrot.slane %v775, %v779
        %v781 = vlaneseq
        %v782 = vshrl.u32 %v781, 7
        %v783 = vsub.s32 1, %v782
        %v784 = vrot.slane %v775, %v783
        %v787 = vmul.f32 %v773, %v780
        %v788 = vmul.f32 %v774, %v784
        %789 = vst [vmem:[#allocation3 + $0x80] sm:$0xff] %v787
        %790 = vst [vmem:[#allocation3 + $0x88] sm:$0xff] %v788
        %v791 = vld [vmem:[%s4] sm:$0xff]
        %v792 = vld [vmem:[#allocation3] sm:$0xff]
        %v793 = vld [vmem:[#allocation3 + $0x8] sm:$0xff]
        %v794 = vld [vmem:[#allocation3 + $0x10] sm:$0xff]
        %v795 = vld [vmem:[#allocation3 + $0x18] sm:$0xff]
        %v796 = vld [vmem:[#allocation3 + $0x20] sm:$0xff]
        %v797 = vld [vmem:[#allocation3 + $0x28] sm:$0xff]
        %v798 = vld [vmem:[#allocation3 + $0x30] sm:$0xff]
        %v799 = vld [vmem:[#allocation3 + $0x38] sm:$0xff]
        %v800 = vld [vmem:[#allocation3 + $0x40] sm:$0xff]
        %v801 = vld [vmem:[#allocation3 + $0x48] sm:$0xff]
        %v802 = vld [vmem:[#allocation3 + $0x50] sm:$0xff]
        %v803 = vld [vmem:[#allocation3 + $0x58] sm:$0xff]
        %v804 = vld [vmem:[#allocation3 + $0x60] sm:$0xff]
        %v805 = vld [vmem:[#allocation3 + $0x68] sm:$0xff]
        %v806 = vld [vmem:[#allocation3 + $0x70] sm:$0xff]
        %v807 = vld [vmem:[#allocation3 + $0x78] sm:$0xff]
        %v808 = vld [vmem:[#allocation3 + $0x80] sm:$0xff]
        %v809 = vld [vmem:[#allocation3 + $0x88] sm:$0xff]
        %v810 = vld [vmem:[%s5] sm:$0xff]
        %812 = vset.pattern.permute.xlu0 0
        %813 = vperm.xlu0 %812, %v810
        %v814 = vpop.permute.xlu0 %813
        %v817 = vsel %vm522, %v791, 0
        %819 = vmatprep.subr.mxu0 %v793
        %820 = vmatpush1.msra.mxu0 %v792
        %821 = vmatprep.subr.mxu0 %v795
        %822 = vmatpush1.msra.mxu0 %v794
        %823 = vmatprep.subr.mxu0 %v797
        %824 = vmatpush1.msra.mxu0 %v796
        %825 = vmatprep.subr.mxu0 %v799
        %826 = vmatpush1.msra.mxu0 %v798
        %827 = vmatprep.subr.mxu0 %v801
        %828 = vmatpush1.msra.mxu0 %v800
        %829 = vmatprep.subr.mxu0 %v803
        %830 = vmatpush1.msra.mxu0 %v802
        %831 = vmatprep.subr.mxu0 %v805
        %832 = vmatpush1.msra.mxu0 %v804
        %833 = vmatprep.subr.mxu0 %v807
        %834 = vmatpush1.msra.mxu0 %v806
        %835 = vmatprep.subr.mxu0 %v809
        %836 = vmatpush1.msra.mxu0 %v808
        %837 = vmatprep.subr.mxu0 0.0
        %838 = vmatpush1.msra.mxu0 0.0
        %839 = vmatprep.subr.mxu0 0.0
        %840 = vmatpush1.msra.mxu0 0.0
        %841 = vmatprep.subr.mxu0 0.0
        %842 = vmatpush1.msra.mxu0 0.0
        %843 = vmatprep.subr.mxu0 0.0
        %844 = vmatpush1.msra.mxu0 0.0
        %845 = vmatprep.subr.mxu0 0.0
        %846 = vmatpush1.msra.mxu0 0.0
        %847 = vmatprep.subr.mxu0 0.0
        %848 = vmatpush1.msra.mxu0 0.0
        %849 = vmatprep.subr.mxu0 0.0
        %850 = vmatpush1.msra.mxu0 0.0
        %851 = vmatprep.subr.mxu0 0.0
        %852 = vmatpush1.msra.mxu0 0.0
        %853 = vmatprep.subr.mxu0 0.0
        %854 = vmatpush1.msra.mxu0 0.0
        %855 = vmatprep.subr.mxu0 0.0
        %856 = vmatpush1.msra.mxu0 0.0
        %857 = vmatprep.subr.mxu0 0.0
        %858 = vmatpush1.msra.mxu0 0.0
        %859 = vmatprep.subr.mxu0 0.0
        %860 = vmatpush1.msra.mxu0 0.0
        %861 = vmatprep.subr.mxu0 0.0
        %862 = vmatpush1.msra.mxu0 0.0
        %863 = vmatprep.subr.mxu0 0.0
        %864 = vmatpush1.msra.mxu0 0.0
        %865 = vmatprep.subr.mxu0 0.0
        %866 = vmatpush1.msra.mxu0 0.0
        %867 = vmatprep.subr.mxu0 0.0
        %868 = vmatpush1.msra.mxu0 0.0
        %869 = vmatprep.subr.mxu0 0.0
        %870 = vmatpush1.msra.mxu0 0.0
        %871 = vmatprep.subr.mxu0 0.0
        %872 = vmatpush1.msra.mxu0 0.0
        %873 = vmatprep.subr.mxu0 0.0
        %874 = vmatpush1.msra.mxu0 0.0
        %875 = vmatprep.subr.mxu0 0.0
        %876 = vmatpush1.msra.mxu0 0.0
        %877 = vmatprep.subr.mxu0 0.0
        %878 = vmatpush1.msra.mxu0 0.0
        %879 = vmatprep.subr.mxu0 0.0
        %880 = vmatpush1.msra.mxu0 0.0
        %881 = vmatprep.subr.mxu0 0.0
        %882 = vmatpush1.msra.mxu0 0.0
        %883 = vmatprep.mubr.f32.mxu0 0.0
        %884 = vmatmul.mubr.f32.gmra.mrb[0].mxu0 %v817
        %v885 = vpop.f32.mrb[0].mxu0
        %v886 = vadd.f32 %v814, %v885
        %v887 = vpop.f32.mrb[0].mxu0
        %v888 = vadd.f32 %v814, %v887
        %889 = vdwg.mxu0
        %v890 = vmax.f32 %v886, 0.0
        %v891 = vmax.f32 %v888, 0.0
        %892 = vst [vmem:[%s282] sm:$0xff] %v890
        %893 = vst [vmem:[%s282 + $0x8] sm:$0xff] %v891
        %s894 = sand.u32 %s163, 1
        %s895 = scalar_lea.sflag [#allocation6], %s894
        %s896 = sand.u32 %s163, 1
        %s897 = smul.addr %s896, 16
        %s898 = scalar_lea.vmem [#allocation9], %s897
        // Predicated region
        $region53: #{tpu_custom_call.1} parent=43 // pred_check
          %p899 = pneg %p173
        $region54: #{tpu_custom_call.1} parent=43 // pred_check_branch
          %901 = sbr.rel (%p899) target = $region56
        $region55: #{tpu_custom_call.1} parent=43 // pred_region
          %s902 = smul.u32 2, %s24
          %s904 = ssub.s32 256, 256
          %905 = vsyncadd %s895, %s904
          %s906 = smul.addr %s902, 128
          %s907 = scalar_lea.hbm %s6, %s906
          %s909 = sshll.u32 %s898, 4
          %s910 = int_to_ptr.vmem [resolvable:$true] %s909
          %912 = dma.vmem_to_hbm [thread:$0]  %s910, 256, %s907, %s895
        $region56: #{tpu_custom_call.1} parent=43 // pred_fallthru
          _
      $region44: #{tpu_custom_call.1} parent=5 // pred_fallthru
        _
      %p913 = scmp.le.s32.totalorder 2, %s19
      // Predicated region
      $region57: #{tpu_custom_call.1} parent=5 // pred_check
        %p914 = pneg %p913
      $region58: #{tpu_custom_call.1} parent=5 // pred_check_branch
        %916 = sbr.rel (%p914) target = $region60
      $region59: #{tpu_custom_call.1} parent=5 // pred_region
        %s917 = ssub.s32 %s19, 2
        // Predicated region
        $region61: #{tpu_custom_call.1} parent=59 // pred_check
          %p918 = pneg %p179
        $region62: #{tpu_custom_call.1} parent=59 // pred_check_branch
          %920 = sbr.rel (%p918) target = $region64
        $region63: #{tpu_custom_call.1} parent=59 // pred_region
          %s921 = sand.u32 %s164, 1
          %s922 = scalar_lea.sflag [#allocation6], %s921
          %s923 = sand.u32 %s164, 1
          %s924 = smul.addr %s923, 16
          %s925 = scalar_lea.vmem [#allocation9], %s924
          %926 = dma.done %s922, 256
        $region64: #{tpu_custom_call.1} parent=59 // pred_fallthru
          _
      $region60: #{tpu_custom_call.1} parent=5 // pred_fallthru
        _
    $region6: #{tpu_custom_call.1} parent=1 // loop_footer
      %s23 = sadd.s32 1, %s19
    $region7: #{tpu_custom_call.1} parent=1 // loop_footer_branch
      %18 = sbr.rel target = $region3
    $region8: #{tpu_custom_call.1} parent=1 // loop_exit
      _
    %927 = vsyncpa [#allocation5], 1
    %s928 = scalar_lea.sflag [#allocation5], 1
    %929 = vsyncpa %s928, 1
    %930 = vsyncpa [#allocation8], 1
    %931 = vsyncpa [#allocation6], 1
    %s932 = scalar_lea.sflag [#allocation6], 1
    %933 = vsyncpa %s932, 1

</llo_original>
